<compile_context>
chip_gen: v7x
topology: tpu7x:2x2x1
jax: 0.10.0
libtpu: 0.0.40
codegen_flags: <defaults>
</compile_context>

<pallas_src>
import math
import functools

import jax
import jax.numpy as jnp
from jax import lax
from jax.experimental import pallas as pl
from jax.experimental.pallas import tpu as pltpu


def make_positional_table(max_len: int, d_model: int, dtype=jnp.float32):
    """Deterministic sinusoidal table, same math as the PyTorch __init__."""
    position = jnp.arange(max_len, dtype=jnp.float32)[:, None]              # [L, 1]
    div_term = jnp.exp(
        jnp.arange(0, d_model, 2, dtype=jnp.float32) * (-math.log(10000.0) / d_model)
    )                                                                        # [D/2]
    pe = jnp.zeros((max_len, d_model), dtype=jnp.float32)
    pe = pe.at[:, 0::2].set(jnp.sin(position * div_term))
    pe = pe.at[:, 1::2].set(jnp.cos(position * div_term))
    return pe.astype(dtype)


def _hash_u32(x):
    """lowbias32 integer hash: counter-based PRNG, platform-agnostic."""
    x = x ^ (x >> 16)
    x = x * jnp.uint32(0x7FEB352D)
    x = x ^ (x >> 15)
    x = x * jnp.uint32(0x846CA68B)
    x = x ^ (x >> 16)
    return x


def _pos_emb_kernel(seed_ref, x_ref, pe_ref, o_ref, *, p_dropout, training, ts, B, BD):
    # x_ref : (ts, B*D) flattened (batch, embed) tile -> lane/sublane-dense I/O
    # pe_ref: (ts, D)   positional rows for this sequence tile
    pe_t = pe_ref[...].astype(jnp.float32)
    if B > 1:
        # Broadcast over batch == replicate along lanes with period D.
        # One small in-VMEM concat per tile instead of B x extra pe HBM reads.
        pe_row = jnp.concatenate([pe_t] * B, axis=-1)            # (ts, B*D)
    else:
        pe_row = pe_t
    y = x_ref[...].astype(jnp.float32) + pe_row

    if training and p_dropout > 0.0:
        # Inverted dropout. Hash of the ABSOLUTE flat element index (+ seed) so
        # the mask is independent of the chosen tile size; integer-domain keep
        # test (no shift / int->float convert / scale chain).
        seq0 = (pl.program_id(0) * ts).astype(jnp.uint32)
        base = seq0 * jnp.uint32(BD) + seed_ref[0].astype(jnp.uint32) * jnp.uint32(0x9E3779B9)
        r = lax.broadcasted_iota(jnp.int32, y.shape, 0).astype(jnp.uint32)
        c = lax.broadcasted_iota(jnp.int32, y.shape, 1).astype(jnp.uint32)
        bits = _hash_u32(r * jnp.uint32(BD) + c + base)

        threshold = jnp.uint32(int(round(p_dropout * 4294967296.0)) & 0xFFFFFFFF)
        inv_keep = 1.0 / (1.0 - p_dropout)          # hoisted Python constant
        y = jnp.where(bits >= threshold, y * inv_keep, 0.0)
    # training=False -> dropout is identity, matching PyTorch eval semantics.

    o_ref[...] = y.astype(o_ref.dtype)


def _choose_ts(S, row_elems, itemsize, target_bytes=2 << 20):
    """Sequence-tile (rows per block) keeping the x tile ~<= target_bytes so the
    grid has several steps (DMA/compute overlap) while double-buffered in+out+pe
    stays far under scoped VMEM on every generation. Rows per block are a
    multiple of 8 (sublane-dense) unless a single block covers all of S."""
    row_bytes = max(row_elems * itemsize, 1)
    cap = max(1, target_bytes // row_bytes)
    if S <= cap:
        return S                       # small input: single block is fine
    return min(S, max(8, (cap // 8) * 8))


def positional_embedding(x, pe, *, p_dropout=0.1, training=False, seed=0, ts=None,
                         vmem_limit_bytes=32 * 1024 * 1024):
    """x: [S, B, D]; pe: [max_len, D] with max_len >= S. Returns [S, B, D]."""
    S, B, D = x.shape
    max_len, d_model = pe.shape
    assert max_len >= S and d_model == D
    BD = B * D

    # Free, contiguous reshape: present a lane-dense 2-D slab to the kernel so
    # loads/stores are wide and unmasked (biggest lever for a mem-bound kernel).
    x2 = x.reshape(S, BD)

    if ts is None:
        ts = _choose_ts(S, BD, jnp.dtype(x.dtype).itemsize)
    ts = int(ts)
    grid = (pl.cdiv(S, ts),)           # ragged last block handled by Pallas

    # Block legality: second-minor block dim must be a multiple of 8 or equal
    # the array's own dim. x / out satisfy this by construction; pe needs a
    # tiny slice only in the rare S < 8 (and S != max_len) case.
    pe_in = pe if (ts % 8 == 0 or S == max_len) else pe[:S]

    kernel = functools.partial(
        _pos_emb_kernel, p_dropout=float(p_dropout), training=bool(training),
        ts=ts, B=int(B), BD=int(BD))
    seed_arr = jnp.asarray([seed], dtype=jnp.int32)

    out2 = pl.pallas_call(
        kernel,
        out_shape=jax.ShapeDtypeStruct((S, BD), x.dtype),
        grid_spec=pltpu.PrefetchScalarGridSpec(
            num_scalar_prefetch=1,                       # dropout seed in SMEM
            grid=grid,
            in_specs=[
                pl.BlockSpec((ts, BD), lambda i, sref: (i, 0)),
                pl.BlockSpec((ts, D), lambda i, sref: (i, 0)),
            ],
            out_specs=pl.BlockSpec((ts, BD), lambda i, sref: (i, 0)),
        ),
        compiler_params=pltpu.CompilerParams(
            # disjoint output tiles per step -> safe to shard across TCs (v7x)
            dimension_semantics=("parallel",),
            vmem_limit_bytes=vmem_limit_bytes,
        ),
    )(seed_arr, x2, pe_in)

    return out2.reshape(S, B, D)


def _dropout_mask_ref(S, B, D, seed, p):
    """Host-side recomputation of the kernel's keep-mask (testing only)."""
    s = jnp.arange(S, dtype=jnp.uint32)[:, None, None]
    b = jnp.arange(B, dtype=jnp.uint32)[None, :, None]
    d = jnp.arange(D, dtype=jnp.uint32)[None, None, :]
    flat = (s * jnp.uint32(B) + b) * jnp.uint32(D) + d
    seed_mix = jnp.asarray(seed, jnp.uint32) * jnp.uint32(0x9E3779B9)
    bits = _hash_u32(flat + seed_mix)
    threshold = jnp.uint32(int(round(p * 4294967296.0)) & 0xFFFFFFFF)
    return bits >= threshold


if __name__ == "__main__":
    D = 32
    max_len = 64
    pe = make_positional_table(max_len, D)

    # --- eval mode (dropout = identity): deterministic, check vs reference ---
    S, B = 8, 2
    x = jax.random.normal(jax.random.PRNGKey(0), (S, B, D), dtype=jnp.float32)
    out = jax.block_until_ready(
        positional_embedding(x, pe, p_dropout=0.1, training=False))
    ref = x + pe[:S][:, None, :]
    assert out.shape == (S, B, D)
    assert jnp.allclose(out, ref, atol=1e-6, rtol=1e-6)

    # --- training mode (inverted dropout), multi-tile grid, exact-match check ---
    S2, B2, p, seed = 32, 2, 0.1, 123
    x_tr = jax.random.normal(jax.random.PRNGKey(1), (S2, B2, D), dtype=jnp.float32)
    out_tr = jax.block_until_ready(
        positional_embedding(x_tr, pe, p_dropout=p, training=True, seed=seed, ts=8))
    ref_tr = x_tr + pe[:S2][:, None, :]
    mask = _dropout_mask_ref(S2, B2, D, seed, p)
    expected = jnp.where(mask, ref_tr / (1.0 - p), 0.0)
    assert out_tr.shape == (S2, B2, D)
    assert jnp.allclose(out_tr, expected, atol=1e-5, rtol=1e-5)

    print("KERNEL_OK")
</pallas_src>

<mosaic_0001>
module attributes {stable_mosaic.version = 11 : i64} {
  func.func @_pos_emb_kernel(%arg0: i32, %arg1: memref<1xi32, #tpu.memory_space<smem>>, %arg2: memref<8x64xf32, #tpu.memory_space<vmem>>, %arg3: memref<8x32xf32, #tpu.memory_space<vmem>>, %arg4: memref<8x64xf32, #tpu.memory_space<vmem>>) attributes {dimension_semantics = [#tpu.dimension_semantics<parallel>], iteration_bounds = array<i64: 1>, scalar_prefetch = 1 : i64, scratch_operands = 0 : i64, tpu.core_type = #tpu.core_type<tc>, window_params = [{transform_indices = @transform_0, window_bounds = array<i64: 8, 64>}, {transform_indices = @transform_1, window_bounds = array<i64: 8, 32>}, {transform_indices = @transform_2, window_bounds = array<i64: 8, 64>}]} {
    %c0 = arith.constant 0 : index
    %c0_0 = arith.constant 0 : index
    %0 = vector.load %arg3[%c0, %c0_0] : memref<8x32xf32, #tpu.memory_space<vmem>>, vector<8x32xf32>
    %1 = tpu.concatenate %0, %0 in 1 : vector<8x32xf32>, vector<8x32xf32> -> vector<8x64xf32>
    %c0_1 = arith.constant 0 : index
    %c0_2 = arith.constant 0 : index
    %2 = vector.load %arg2[%c0_1, %c0_2] : memref<8x64xf32, #tpu.memory_space<vmem>>, vector<8x64xf32>
    %3 = arith.addf %2, %1 : vector<8x64xf32>
    %c0_3 = arith.constant 0 : index
    %c0_4 = arith.constant 0 : index
    %4 = vector.load %arg4[%c0_3, %c0_4] : memref<8x64xf32, #tpu.memory_space<vmem>>, vector<8x64xf32>
    tpu.vector_store %arg4[%c0_3, %c0_4], %3 {strides = array<i32>} : memref<8x64xf32, #tpu.memory_space<vmem>>, vector<8x64xf32>,
    return
  }
  func.func @transform_0(%arg0: i32, %arg1: memref<1xi32, #tpu.memory_space<smem>>) -> (i32, i32) {
    %c0_i32 = arith.constant 0 : i32
    %c0_i32_0 = arith.constant 0 : i32
    return %arg0, %c0_i32 : i32, i32
  }
  func.func @transform_1(%arg0: i32, %arg1: memref<1xi32, #tpu.memory_space<smem>>) -> (i32, i32) {
    %c0_i32 = arith.constant 0 : i32
    %c0_i32_0 = arith.constant 0 : i32
    return %arg0, %c0_i32 : i32, i32
  }
  func.func @transform_2(%arg0: i32, %arg1: memref<1xi32, #tpu.memory_space<smem>>) -> (i32, i32) {
    %c0_i32 = arith.constant 0 : i32
    %c0_i32_0 = arith.constant 0 : i32
    return %arg0, %c0_i32 : i32, i32
  }
}

</mosaic_0001>

<llo_original>
// kernel: tpu_custom_call.1
$region0: #{tpu_custom_call.1}
  #allocation0 [shape = 'u32[]', space=smem, size = 0x4, offset = 0x4, fixed_abs, tag = 'smem constant byte address 0x4 - core index']
  #allocation1 [shape = 'u32[144,128]{1,0:T(1,128)}', space=vmem, size = 0x12000, scoped, tag = 'internal scratch']
  #allocation2 [shape = 's32[1]{0}', space=sflag, size = 0x4, scoped, tag = 'scoped memory for tpu_custom_call.1']
  #allocation3 [shape = 's32[1]{0:T(128)S(6)}', space=smem, size = 0x200, scoped, tag = 'prefetched SMEM operand 0']
  %s0 = inlined_call_operand.<no memory space> [shape: s32[1], index: 0, kind: input, shape index: {}]
  %s1 = inlined_call_operand.vmem [shape: f32[8,64], index: 1, kind: input, shape index: {}]
  %s2 = inlined_call_operand.vmem [shape: f32[64,32], index: 2, kind: input, shape index: {}]
  %s3 = inlined_call_operand.hbm [shape: f32[8,64], index: 3, kind: output, shape index: {}]
  %s4 = sld [smem:[#allocation0]]
  $region18: #{tpu_custom_call.1} parent=0
    _
  %s6 = ssub.s32 1, %s4
  %s7 = scalar_select 0, %s6, %s4
  %8 = sst [smem:[#allocation3]] %s0
  $region1: #{tpu_custom_call.1} parent=0
    #allocation4 [shape = 'u8[4096]{0}', space=vmem, size = 0x1000, scoped, tag = 'output window, operand 0, single buffered']
    #allocation5 [shape = 's32[1]{0}', space=sflag, size = 0x4, scoped, tag = 'scoped memory for tpu_custom_call.1']
    %9 = vsyncpa [#allocation5], 0
    // Predicated region
    $region2: #{tpu_custom_call.1} parent=1 // pred_check
      _
    $region3: #{tpu_custom_call.1} parent=1 // pred_check_branch
      %11 = sbr.rel (0) target = $region5
    $region4: #{tpu_custom_call.1} parent=1 // pred_region
      _
    $region5: #{tpu_custom_call.1} parent=1 // pred_fallthru
      _
    // Predicated region
    $region6: #{tpu_custom_call.1} parent=1 // pred_check
      _
    $region7: #{tpu_custom_call.1} parent=1 // pred_check_branch
      %13 = sbr.rel (0) target = $region9
    $region8: #{tpu_custom_call.1} parent=1 // pred_region
      _
    $region9: #{tpu_custom_call.1} parent=1 // pred_fallthru
      _
    %v14 = vld [vmem:[%s2] sm:$0xff]
    %16 = vrot.lane.b32.xlu0 %v14, 32
    %v17 = vpop.permute.xlu0 %16
    %vm19 = vcmask 261120
    %v20 = vsel %vm19, %v14, %v17
    %v21 = vld [vmem:[%s1] sm:$0xff]
    %v22 = vadd.f32 %v21, %v20
    %vm23 = vcmask 523264
    %24 = vst.msk [vmem:[#allocation4] sm:$0xff] %vm23, %v22
    // Predicated region
    $region10: #{tpu_custom_call.1} parent=1 // pred_check
      _
    $region11: #{tpu_custom_call.1} parent=1 // pred_check_branch
      %26 = sbr.rel (0) target = $region13
    $region12: #{tpu_custom_call.1} parent=1 // pred_region
      %s28 = ssub.s32 128, 128
      %29 = vsyncadd [#allocation5], %s28
      %s31 = sshll.u32 [#allocation4], 4
      %s32 = int_to_ptr.vmem [resolvable:$true] %s31
      %34 = dma.vmem_to_hbm [thread:$0]  %s32, 128, %s3, [#allocation5]
    $region13: #{tpu_custom_call.1} parent=1 // pred_fallthru
      _
    // Predicated region
    $region14: #{tpu_custom_call.1} parent=1 // pred_check
      _
    $region15: #{tpu_custom_call.1} parent=1 // pred_check_branch
      %36 = sbr.rel (0) target = $region17
    $region16: #{tpu_custom_call.1} parent=1 // pred_region
      %37 = dma.done [#allocation5], 128
    $region17: #{tpu_custom_call.1} parent=1 // pred_fallthru
      _
    %38 = vsyncpa [#allocation5], 1

</llo_original>
